<compile_context>
chip_gen: v6e
topology: v6e:2x2x1
jax: 0.10.0
libtpu: 0.0.40
codegen_flags: <defaults>
</compile_context>

<pallas_src>
import jax
import jax.numpy as jnp
from jax import lax
from jax.experimental import pallas as pl
from jax.experimental.pallas import tpu as pltpu  # noqa: F401  (kept for parity / future scratch use)


def _siamese_head_kernel(x_ref, wt_ref, b_ref, o_ref):
    """out = x @ wT^T + b   with x (B, 2K), wT (N, 2K), b (1, N)."""
    out = lax.dot_general(
        x_ref[...],
        wt_ref[...],
        # Contract the lane (last) dim of both operands: 'bk,nk->bn'.
        dimension_numbers=(((1,), (1,)), ((), ())),
        preferred_element_type=jnp.float32,
    )
    o_ref[...] = (out + b_ref[...]).astype(o_ref.dtype)


def siamese_head(feat1, feat2, fc_weight, fc_bias):
    """Pallas implementation of: Linear(cat(feat1, feat2, dim=1)).

    feat1, feat2 : (B, K)    backbone features per branch (K = num_ftrs_resnet)
    fc_weight    : (2K, N)   nn.Linear weight, stored as (in_features, out_features)
    fc_bias      : (N,)
    """
    B, K = feat1.shape
    assert feat2.shape == (B, K)
    twoK, N = fc_weight.shape
    assert twoK == 2 * K and fc_bias.shape == (N,)

    # cat(f1, f2) @ W == [f1 | f2] @ W: fold the two branch matmuls into one by
    # concatenating along K in the wrapper (tiny (B, 2K) intermediate).
    x = jnp.concatenate([feat1, feat2], axis=1)     # (B, 2K)
    # Lane-dense weight orientation: (N, 2K) instead of (2K, N).
    wt = fc_weight.T                                # (N, 2K)
    b2d = fc_bias.reshape(1, N)                     # 2D so N sits on lanes

    # Single-step grid, full-array blocks: any K tiling here would only add
    # per-grid-step overhead for this problem size.
    return pl.pallas_call(
        _siamese_head_kernel,
        out_shape=jax.ShapeDtypeStruct((B, N), feat1.dtype),
        grid=(1,),
        in_specs=[
            pl.BlockSpec((B, 2 * K), lambda i: (0, 0)),   # activations, lane-dense
            pl.BlockSpec((N, 2 * K), lambda i: (0, 0)),   # weight, lane-dense
            pl.BlockSpec((1, N), lambda i: (0, 0)),       # bias (resident)
        ],
        out_specs=pl.BlockSpec((B, N), lambda i: (0, 0)),
    )(x, wt, b2d)


if __name__ == "__main__":
    key = jax.random.PRNGKey(0)
    k1, k2, k3, k4 = jax.random.split(key, 4)

    B = 2
    NUM_FTRS = 2048   # resnet101 fc.in_features
    N_CLASSES = 2

    # Frozen-backbone features for the two branches (stand-ins for resnet(input1/2)).
    feat1 = jax.random.normal(k1, (B, NUM_FTRS), dtype=jnp.float32)
    feat2 = jax.random.normal(k2, (B, NUM_FTRS), dtype=jnp.float32)

    # nn.Linear(2*NUM_FTRS, 2) parameters, stored as (in_features, out_features).
    fc_weight = jax.random.normal(k3, (2 * NUM_FTRS, N_CLASSES), dtype=jnp.float32) * 0.01
    fc_bias = jax.random.normal(k4, (N_CLASSES,), dtype=jnp.float32)

    out = siamese_head(feat1, feat2, fc_weight, fc_bias)
    jax.block_until_ready(out)

    # Pure-JAX reference of the PyTorch head: cat then Linear.
    ref = jnp.concatenate([feat1, feat2], axis=1) @ fc_weight + fc_bias

    assert out.shape == (B, N_CLASSES)
    assert out.dtype == jnp.float32
    assert bool(jnp.allclose(out, ref, rtol=1e-4, atol=1e-4))

    print("KERNEL_OK")
</pallas_src>

<mosaic_0001>
module attributes {stable_mosaic.version = 11 : i64} {
  func.func @_siamese_head_kernel(%arg0: i32, %arg1: memref<2x4096xf32, #tpu.memory_space<vmem>>, %arg2: memref<2x4096xf32, #tpu.memory_space<vmem>>, %arg3: memref<1x2xf32, #tpu.memory_space<vmem>>, %arg4: memref<2x2xf32, #tpu.memory_space<vmem>>) attributes {dimension_semantics = [#tpu.dimension_semantics<arbitrary>], iteration_bounds = array<i64: 1>, scalar_prefetch = 0 : i64, scratch_operands = 0 : i64, tpu.core_type = #tpu.core_type<tc>, window_params = [{pipeline_mode = #tpu.pipeline_mode<synchronous>, transform_indices = @transform_0, window_bounds = array<i64: 2, 4096>}, {pipeline_mode = #tpu.pipeline_mode<synchronous>, transform_indices = @transform_1, window_bounds = array<i64: 2, 4096>}, {pipeline_mode = #tpu.pipeline_mode<synchronous>, transform_indices = @transform_2, window_bounds = array<i64: 1, 2>}, {pipeline_mode = #tpu.pipeline_mode<synchronous>, transform_indices = @transform_3, window_bounds = array<i64: 2, 2>}]} {
    %c0 = arith.constant 0 : index
    %c0_0 = arith.constant 0 : index
    %0 = vector.load %arg1[%c0, %c0_0] : memref<2x4096xf32, #tpu.memory_space<vmem>>, vector<2x4096xf32>
    %c0_1 = arith.constant 0 : index
    %c0_2 = arith.constant 0 : index
    %1 = vector.load %arg2[%c0_1, %c0_2] : memref<2x4096xf32, #tpu.memory_space<vmem>>, vector<2x4096xf32>
    %cst = arith.constant dense<0.000000e+00> : vector<2x2xf32>
    %2 = tpu.matmul %0, %1, %cst {dimension_numbers = #tpu.dot_dimension_numbers<[1], [1], [0], [0], [0, 0, 1, 0], [], []>} : vector<2x4096xf32>, vector<2x4096xf32>, vector<2x2xf32> -> vector<2x2xf32>
    %c0_3 = arith.constant 0 : index
    %c0_4 = arith.constant 0 : index
    %3 = vector.load %arg3[%c0_3, %c0_4] : memref<1x2xf32, #tpu.memory_space<vmem>>, vector<1x2xf32>
    %4 = vector.broadcast %3 : vector<1x2xf32> to vector<2x2xf32>
    %5 = arith.addf %2, %4 : vector<2x2xf32>
    %c0_5 = arith.constant 0 : index
    %c0_6 = arith.constant 0 : index
    %6 = vector.load %arg4[%c0_5, %c0_6] : memref<2x2xf32, #tpu.memory_space<vmem>>, vector<2x2xf32>
    tpu.vector_store %arg4[%c0_5, %c0_6], %5 {strides = array<i32>} : memref<2x2xf32, #tpu.memory_space<vmem>>, vector<2x2xf32>,
    return
  }
  func.func @transform_0(%arg0: i32) -> (i32, i32) {
    %c0_i32 = arith.constant 0 : i32
    %c0_i32_0 = arith.constant 0 : i32
    %c0_i32_1 = arith.constant 0 : i32
    return %c0_i32, %c0_i32_0 : i32, i32
  }
  func.func @transform_1(%arg0: i32) -> (i32, i32) {
    %c0_i32 = arith.constant 0 : i32
    %c0_i32_0 = arith.constant 0 : i32
    %c0_i32_1 = arith.constant 0 : i32
    return %c0_i32, %c0_i32_0 : i32, i32
  }
  func.func @transform_2(%arg0: i32) -> (i32, i32) {
    %c0_i32 = arith.constant 0 : i32
    %c0_i32_0 = arith.constant 0 : i32
    %c0_i32_1 = arith.constant 0 : i32
    return %c0_i32, %c0_i32_0 : i32, i32
  }
  func.func @transform_3(%arg0: i32) -> (i32, i32) {
    %c0_i32 = arith.constant 0 : i32
    %c0_i32_0 = arith.constant 0 : i32
    %c0_i32_1 = arith.constant 0 : i32
    return %c0_i32, %c0_i32_0 : i32, i32
  }
}

</mosaic_0001>

<llo_original>
// kernel: tpu_custom_call.1
$region0: #{tpu_custom_call.1}
  #allocation0 [shape = 'u32[]', space=smem, size = 0x4, offset = 0x4, fixed_abs, tag = 'smem constant byte address 0x4 - core index']
  #allocation1 [shape = 'u32[144,128]{1,0:T(1,128)}', space=vmem, size = 0x12000, scoped, tag = 'internal scratch']
  %s0 = inlined_call_operand.hbm [shape: f32[2,4096], index: 0, kind: input, shape index: {}]
  %s1 = inlined_call_operand.hbm [shape: f32[2,4096], index: 1, kind: input, shape index: {}]
  %s2 = inlined_call_operand.vmem [shape: f32[1,2], index: 2, kind: input, shape index: {}]
  %s3 = inlined_call_operand.hbm [shape: f32[2,2], index: 3, kind: output, shape index: {}]
  %s4 = sld [smem:[#allocation0]]
  $region30: #{tpu_custom_call.1} parent=0
    _
  %s6 = ssub.s32 1, %s4
  %s7 = scalar_select 0, %s6, %s4
  $region1: #{tpu_custom_call.1} parent=0
    #allocation2 [shape = 'u8[32768]{0}', space=vmem, size = 0x8000, scoped, tag = 'input window, operand 0, single buffered']
    #allocation3 [shape = 's32[1]{0}', space=sflag, size = 0x4, scoped, tag = 'scoped memory for tpu_custom_call.1']
    #allocation4 [shape = 's32[1]{0}', space=sflag, size = 0x4, scoped, tag = 'scoped memory for tpu_custom_call.1']
    #allocation5 [shape = 'u8[32768]{0}', space=vmem, size = 0x8000, scoped, tag = 'input window, operand 1, single buffered']
    #allocation6 [shape = 's32[1]{0}', space=sflag, size = 0x4, scoped, tag = 'scoped memory for tpu_custom_call.1']
    #allocation7 [shape = 'u8[1024]{0}', space=vmem, size = 0x400, scoped, tag = 'output window, operand 0, single buffered']
    %8 = vsyncpa [#allocation3], 0
    %9 = vsyncpa [#allocation6], 0
    %10 = vsyncpa [#allocation4], 0
    // Predicated region
    $region2: #{tpu_custom_call.1} parent=1 // pred_check
      _
    $region3: #{tpu_custom_call.1} parent=1 // pred_check_branch
      %12 = sbr.rel (0) target = $region5
    $region4: #{tpu_custom_call.1} parent=1 // pred_region
      %s14 = ssub.s32 1024, 1024
      %15 = vsyncadd [#allocation3], %s14
      %s17 = sshll.u32 [#allocation2], 4
      %s18 = int_to_ptr.vmem [resolvable:$true] %s17
      %20 = dma.hbm_to_vmem [thread:$0]  %s0, 1024, %s18, [#allocation3]
    $region5: #{tpu_custom_call.1} parent=1 // pred_fallthru
      _
    // Predicated region
    $region6: #{tpu_custom_call.1} parent=1 // pred_check
      _
    $region7: #{tpu_custom_call.1} parent=1 // pred_check_branch
      %22 = sbr.rel (0) target = $region9
    $region8: #{tpu_custom_call.1} parent=1 // pred_region
      %s24 = ssub.s32 1024, 1024
      %25 = vsyncadd [#allocation6], %s24
      %s27 = sshll.u32 [#allocation5], 4
      %s28 = int_to_ptr.vmem [resolvable:$true] %s27
      %30 = dma.hbm_to_vmem [thread:$0]  %s1, 1024, %s28, [#allocation6]
    $region9: #{tpu_custom_call.1} parent=1 // pred_fallthru
      _
    // Predicated region
    $region10: #{tpu_custom_call.1} parent=1 // pred_check
      _
    $region11: #{tpu_custom_call.1} parent=1 // pred_check_branch
      %32 = sbr.rel (0) target = $region13
    $region12: #{tpu_custom_call.1} parent=1 // pred_region
      _
    $region13: #{tpu_custom_call.1} parent=1 // pred_fallthru
      _
    // Predicated region
    $region14: #{tpu_custom_call.1} parent=1 // pred_check
      _
    $region15: #{tpu_custom_call.1} parent=1 // pred_check_branch
      %34 = sbr.rel (0) target = $region17
    $region16: #{tpu_custom_call.1} parent=1 // pred_region
      %35 = dma.done [#allocation3], 1024
    $region17: #{tpu_custom_call.1} parent=1 // pred_fallthru
      _
    // Predicated region
    $region18: #{tpu_custom_call.1} parent=1 // pred_check
      _
    $region19: #{tpu_custom_call.1} parent=1 // pred_check_branch
      %37 = sbr.rel (0) target = $region21
    $region20: #{tpu_custom_call.1} parent=1 // pred_region
      %38 = dma.done [#allocation6], 1024
    $region21: #{tpu_custom_call.1} parent=1 // pred_fallthru
      _
    %v39 = vld [vmem:[#allocation2] sm:$0xff]
    %v40 = vld [vmem:[#allocation2 + $0x8] sm:$0xff]
    %v41 = vld [vmem:[#allocation2 + $0x10] sm:$0xff]
    %v42 = vld [vmem:[#allocation2 + $0x18] sm:$0xff]
    %v43 = vld [vmem:[#allocation2 + $0x20] sm:$0xff]
    %v44 = vld [vmem:[#allocation2 + $0x28] sm:$0xff]
    %v45 = vld [vmem:[#allocation2 + $0x30] sm:$0xff]
    %v46 = vld [vmem:[#allocation2 + $0x38] sm:$0xff]
    %v47 = vld [vmem:[#allocation5] sm:$0xff]
    %v48 = vld [vmem:[#allocation5 + $0x8] sm:$0xff]
    %v49 = vld [vmem:[#allocation5 + $0x10] sm:$0xff]
    %v50 = vld [vmem:[#allocation5 + $0x18] sm:$0xff]
    %v51 = vld [vmem:[#allocation5 + $0x20] sm:$0xff]
    %v52 = vld [vmem:[#allocation5 + $0x28] sm:$0xff]
    %v53 = vld [vmem:[#allocation5 + $0x30] sm:$0xff]
    %v54 = vld [vmem:[#allocation5 + $0x38] sm:$0xff]
    %v55 = vld [vmem:[%s2] sm:$0x1]
    %v57 = vlaneseq
    %v58 = vshrl.u32 %v57, 7
    %v59 = vsub.s32 0, %v58
    %v60 = vrot.slane %v55, %v59
    %v70 = vcombine.high %v39, %v39
    %v72 = vunpack.c.l.s4 1983009808
    %v73 = vunpack.c.0.s8 %v72
    %v74 = vlaneseq
    %v75 = vshrl.u32 %v74, 7
    %v76 = vsub.s32 %v73, %v75
    %v77 = vrot.slane %v39, %v76
    %v79 = vunpack.c.l.s4 1983009808
    %v80 = vunpack.c.0.s8 %v79
    %v81 = vlaneseq
    %v82 = vshrl.u32 %v81, 7
    %v83 = vsub.s32 %v80, %v82
    %v84 = vrot.slane %v70, %v83
    %v85 = vcombine.high %v77, %v77
    %v86 = vcombine.high %v84, %v84
    %v87 = vcombine.high %v40, %v40
    %v89 = vunpack.c.l.s4 1983009808
    %v90 = vunpack.c.0.s8 %v89
    %v91 = vlaneseq
    %v92 = vshrl.u32 %v91, 7
    %v93 = vsub.s32 %v90, %v92
    %v94 = vrot.slane %v40, %v93
    %v96 = vunpack.c.l.s4 1983009808
    %v97 = vunpack.c.0.s8 %v96
    %v98 = vlaneseq
    %v99 = vshrl.u32 %v98, 7
    %v100 = vsub.s32 %v97, %v99
    %v101 = vrot.slane %v87, %v100
    %v102 = vcombine.high %v94, %v94
    %v103 = vcombine.high %v101, %v101
    %v104 = vcombine.high %v41, %v41
    %v106 = vunpack.c.l.s4 1983009808
    %v107 = vunpack.c.0.s8 %v106
    %v108 = vlaneseq
    %v109 = vshrl.u32 %v108, 7
    %v110 = vsub.s32 %v107, %v109
    %v111 = vrot.slane %v41, %v110
    %v113 = vunpack.c.l.s4 1983009808
    %v114 = vunpack.c.0.s8 %v113
    %v115 = vlaneseq
    %v116 = vshrl.u32 %v115, 7
    %v117 = vsub.s32 %v114, %v116
    %v118 = vrot.slane %v104, %v117
    %v119 = vcombine.high %v111, %v111
    %v120 = vcombine.high %v118, %v118
    %v121 = vcombine.high %v42, %v42
    %v123 = vunpack.c.l.s4 1983009808
    %v124 = vunpack.c.0.s8 %v123
    %v125 = vlaneseq
    %v126 = vshrl.u32 %v125, 7
    %v127 = vsub.s32 %v124, %v126
    %v128 = vrot.slane %v42, %v127
    %v130 = vunpack.c.l.s4 1983009808
    %v131 = vunpack.c.0.s8 %v130
    %v132 = vlaneseq
    %v133 = vshrl.u32 %v132, 7
    %v134 = vsub.s32 %v131, %v133
    %v135 = vrot.slane %v121, %v134
    %v136 = vcombine.high %v128, %v128
    %v137 = vcombine.high %v135, %v135
    %v138 = vcombine.high %v43, %v43
    %v140 = vunpack.c.l.s4 1983009808
    %v141 = vunpack.c.0.s8 %v140
    %v142 = vlaneseq
    %v143 = vshrl.u32 %v142, 7
    %v144 = vsub.s32 %v141, %v143
    %v145 = vrot.slane %v43, %v144
    %v147 = vunpack.c.l.s4 1983009808
    %v148 = vunpack.c.0.s8 %v147
    %v149 = vlaneseq
    %v150 = vshrl.u32 %v149, 7
    %v151 = vsub.s32 %v148, %v150
    %v152 = vrot.slane %v138, %v151
    %v153 = vcombine.high %v145, %v145
    %v154 = vcombine.high %v152, %v152
    %v155 = vcombine.high %v44, %v44
    %v157 = vunpack.c.l.s4 1983009808
    %v158 = vunpack.c.0.s8 %v157
    %v159 = vlaneseq
    %v160 = vshrl.u32 %v159, 7
    %v161 = vsub.s32 %v158, %v160
    %v162 = vrot.slane %v44, %v161
    %v164 = vunpack.c.l.s4 1983009808
    %v165 = vunpack.c.0.s8 %v164
    %v166 = vlaneseq
    %v167 = vshrl.u32 %v166, 7
    %v168 = vsub.s32 %v165, %v167
    %v169 = vrot.slane %v155, %v168
    %v170 = vcombine.high %v162, %v162
    %v171 = vcombine.high %v169, %v169
    %v172 = vcombine.high %v45, %v45
    %v174 = vunpack.c.l.s4 1983009808
    %v175 = vunpack.c.0.s8 %v174
    %v176 = vlaneseq
    %v177 = vshrl.u32 %v176, 7
    %v178 = vsub.s32 %v175, %v177
    %v179 = vrot.slane %v45, %v178
    %v181 = vunpack.c.l.s4 1983009808
    %v182 = vunpack.c.0.s8 %v181
    %v183 = vlaneseq
    %v184 = vshrl.u32 %v183, 7
    %v185 = vsub.s32 %v182, %v184
    %v186 = vrot.slane %v172, %v185
    %v187 = vcombine.high %v179, %v179
    %v188 = vcombine.high %v186, %v186
    %v189 = vcombine.high %v46, %v46
    %v191 = vunpack.c.l.s4 1983009808
    %v192 = vunpack.c.0.s8 %v191
    %v193 = vlaneseq
    %v194 = vshrl.u32 %v193, 7
    %v195 = vsub.s32 %v192, %v194
    %v196 = vrot.slane %v46, %v195
    %v198 = vunpack.c.l.s4 1983009808
    %v199 = vunpack.c.0.s8 %v198
    %v200 = vlaneseq
    %v201 = vshrl.u32 %v200, 7
    %v202 = vsub.s32 %v199, %v201
    %v203 = vrot.slane %v189, %v202
    %v204 = vcombine.high %v196, %v196
    %v205 = vcombine.high %v203, %v203
    %v246 = vcombine.high %v47, %v47
    %v248 = vunpack.c.l.s4 1983009808
    %v249 = vunpack.c.0.s8 %v248
    %v250 = vlaneseq
    %v251 = vshrl.u32 %v250, 7
    %v252 = vsub.s32 %v249, %v251
    %v253 = vrot.slane %v47, %v252
    %v255 = vunpack.c.l.s4 1983009808
    %v256 = vunpack.c.0.s8 %v255
    %v257 = vlaneseq
    %v258 = vshrl.u32 %v257, 7
    %v259 = vsub.s32 %v256, %v258
    %v260 = vrot.slane %v246, %v259
    %v261 = vcombine.high %v253, %v253
    %v262 = vcombine.high %v260, %v260
    %v263 = vcombine.high %v48, %v48
    %v265 = vunpack.c.l.s4 1983009808
    %v266 = vunpack.c.0.s8 %v265
    %v267 = vlaneseq
    %v268 = vshrl.u32 %v267, 7
    %v269 = vsub.s32 %v266, %v268
    %v270 = vrot.slane %v48, %v269
    %v272 = vunpack.c.l.s4 1983009808
    %v273 = vunpack.c.0.s8 %v272
    %v274 = vlaneseq
    %v275 = vshrl.u32 %v274, 7
    %v276 = vsub.s32 %v273, %v275
    %v277 = vrot.slane %v263, %v276
    %v278 = vcombine.high %v270, %v270
    %v279 = vcombine.high %v277, %v277
    %v280 = vcombine.high %v49, %v49
    %v282 = vunpack.c.l.s4 1983009808
    %v283 = vunpack.c.0.s8 %v282
    %v284 = vlaneseq
    %v285 = vshrl.u32 %v284, 7
    %v286 = vsub.s32 %v283, %v285
    %v287 = vrot.slane %v49, %v286
    %v289 = vunpack.c.l.s4 1983009808
    %v290 = vunpack.c.0.s8 %v289
    %v291 = vlaneseq
    %v292 = vshrl.u32 %v291, 7
    %v293 = vsub.s32 %v290, %v292
    %v294 = vrot.slane %v280, %v293
    %v295 = vcombine.high %v287, %v287
    %v296 = vcombine.high %v294, %v294
    %v297 = vcombine.high %v50, %v50
    %v299 = vunpack.c.l.s4 1983009808
    %v300 = vunpack.c.0.s8 %v299
    %v301 = vlaneseq
    %v302 = vshrl.u32 %v301, 7
    %v303 = vsub.s32 %v300, %v302
    %v304 = vrot.slane %v50, %v303
    %v306 = vunpack.c.l.s4 1983009808
    %v307 = vunpack.c.0.s8 %v306
    %v308 = vlaneseq
    %v309 = vshrl.u32 %v308, 7
    %v310 = vsub.s32 %v307, %v309
    %v311 = vrot.slane %v297, %v310
    %v312 = vcombine.high %v304, %v304
    %v313 = vcombine.high %v311, %v311
    %v314 = vcombine.high %v51, %v51
    %v316 = vunpack.c.l.s4 1983009808
    %v317 = vunpack.c.0.s8 %v316
    %v318 = vlaneseq
    %v319 = vshrl.u32 %v318, 7
    %v320 = vsub.s32 %v317, %v319
    %v321 = vrot.slane %v51, %v320
    %v323 = vunpack.c.l.s4 1983009808
    %v324 = vunpack.c.0.s8 %v323
    %v325 = vlaneseq
    %v326 = vshrl.u32 %v325, 7
    %v327 = vsub.s32 %v324, %v326
    %v328 = vrot.slane %v314, %v327
    %v329 = vcombine.high %v321, %v321
    %v330 = vcombine.high %v328, %v328
    %v331 = vcombine.high %v52, %v52
    %v333 = vunpack.c.l.s4 1983009808
    %v334 = vunpack.c.0.s8 %v333
    %v335 = vlaneseq
    %v336 = vshrl.u32 %v335, 7
    %v337 = vsub.s32 %v334, %v336
    %v338 = vrot.slane %v52, %v337
    %v340 = vunpack.c.l.s4 1983009808
    %v341 = vunpack.c.0.s8 %v340
    %v342 = vlaneseq
    %v343 = vshrl.u32 %v342, 7
    %v344 = vsub.s32 %v341, %v343
    %v345 = vrot.slane %v331, %v344
    %v346 = vcombine.high %v338, %v338
    %v347 = vcombine.high %v345, %v345
    %v348 = vcombine.high %v53, %v53
    %v350 = vunpack.c.l.s4 1983009808
    %v351 = vunpack.c.0.s8 %v350
    %v352 = vlaneseq
    %v353 = vshrl.u32 %v352, 7
    %v354 = vsub.s32 %v351, %v353
    %v355 = vrot.slane %v53, %v354
    %v357 = vunpack.c.l.s4 1983009808
    %v358 = vunpack.c.0.s8 %v357
    %v359 = vlaneseq
    %v360 = vshrl.u32 %v359, 7
    %v361 = vsub.s32 %v358, %v360
    %v362 = vrot.slane %v348, %v361
    %v363 = vcombine.high %v355, %v355
    %v364 = vcombine.high %v362, %v362
    %v365 = vcombine.high %v54, %v54
    %v367 = vunpack.c.l.s4 1983009808
    %v368 = vunpack.c.0.s8 %v367
    %v369 = vlaneseq
    %v370 = vshrl.u32 %v369, 7
    %v371 = vsub.s32 %v368, %v370
    %v372 = vrot.slane %v54, %v371
    %v374 = vunpack.c.l.s4 1983009808
    %v375 = vunpack.c.0.s8 %v374
    %v376 = vlaneseq
    %v377 = vshrl.u32 %v376, 7
    %v378 = vsub.s32 %v375, %v377
    %v379 = vrot.slane %v365, %v378
    %v380 = vcombine.high %v372, %v372
    %v381 = vcombine.high %v379, %v379
    %414 = vmatprep.subr.mxu0 0.0
    %415 = vmatpush1.xpose.msra.mxu0 0.0
    %416 = vmatprep.subr.mxu0 0.0
    %417 = vmatpush1.xpose.msra.mxu0 0.0
    %418 = vmatprep.subr.mxu0 0.0
    %419 = vmatpush1.xpose.msra.mxu0 0.0
    %420 = vmatprep.subr.mxu0 0.0
    %421 = vmatpush1.xpose.msra.mxu0 0.0
    %422 = vmatprep.subr.mxu0 0.0
    %423 = vmatpush1.xpose.msra.mxu0 0.0
    %424 = vmatprep.subr.mxu0 0.0
    %425 = vmatpush1.xpose.msra.mxu0 0.0
    %426 = vmatprep.subr.mxu0 0.0
    %427 = vmatpush1.xpose.msra.mxu0 0.0
    %428 = vmatprep.subr.mxu0 0.0
    %429 = vmatpush1.xpose.msra.mxu0 0.0
    %430 = vmatprep.subr.mxu0 0.0
    %431 = vmatpush1.xpose.msra.mxu0 0.0
    %432 = vmatprep.subr.mxu0 0.0
    %433 = vmatpush1.xpose.msra.mxu0 0.0
    %434 = vmatprep.subr.mxu0 0.0
    %435 = vmatpush1.xpose.msra.mxu0 0.0
    %436 = vmatprep.subr.mxu0 0.0
    %437 = vmatpush1.xpose.msra.mxu0 0.0
    %438 = vmatprep.subr.mxu0 0.0
    %439 = vmatpush1.xpose.msra.mxu0 0.0
    %440 = vmatprep.subr.mxu0 0.0
    %441 = vmatpush1.xpose.msra.mxu0 0.0
    %442 = vmatprep.subr.mxu0 0.0
    %443 = vmatpush1.xpose.msra.mxu0 0.0
    %444 = vmatprep.subr.mxu0 %v261
    %445 = vmatpush1.xpose.msra.mxu0 %v253
    %446 = vmatprep.subr.mxu0 0.0
    %447 = vmatpush2.xpose.msra.mxu0 0.0
    %448 = vmatprep.subr.mxu0 0.0
    %449 = vmatpush2.xpose.msra.mxu0 0.0
    %450 = vmatprep.subr.mxu0 0.0
    %451 = vmatpush2.xpose.msra.mxu0 0.0
    %452 = vmatprep.subr.mxu0 0.0
    %453 = vmatpush2.xpose.msra.mxu0 0.0
    %454 = vmatprep.subr.mxu0 0.0
    %455 = vmatpush2.xpose.msra.mxu0 0.0
    %456 = vmatprep.subr.mxu0 0.0
    %457 = vmatpush2.xpose.msra.mxu0 0.0
    %458 = vmatprep.subr.mxu0 0.0
    %459 = vmatpush2.xpose.msra.mxu0 0.0
    %460 = vmatprep.subr.mxu0 0.0
    %461 = vmatpush2.xpose.msra.mxu0 0.0
    %462 = vmatprep.subr.mxu0 0.0
    %463 = vmatpush2.xpose.msra.mxu0 0.0
    %464 = vmatprep.subr.mxu0 0.0
    %465 = vmatpush2.xpose.msra.mxu0 0.0
    %466 = vmatprep.subr.mxu0 0.0
    %467 = vmatpush2.xpose.msra.mxu0 0.0
    %468 = vmatprep.subr.mxu0 0.0
    %469 = vmatpush2.xpose.msra.mxu0 0.0
    %470 = vmatprep.subr.mxu0 0.0
    %471 = vmatpush2.xpose.msra.mxu0 0.0
    %472 = vmatprep.subr.mxu0 0.0
    %473 = vmatpush2.xpose.msra.mxu0 0.0
    %474 = vmatprep.subr.mxu0 0.0
    %475 = vmatpush2.xpose.msra.mxu0 0.0
    %476 = vmatprep.subr.mxu0 0.0
    %477 = vmatpush2.xpose.msra.mxu0 0.0
    %478 = vmatprep.mubr.f32.mxu0 %v85
    %479 = vmatmul.mubr.f32.gmra.mxu0 %v77
    %v480 = vpop.f32.mrf.mxu0
    %v481 = vadd.f32 %v60, %v480
    %v482 = vpop.f32.mrf.mxu0
    %483 = vdwg.mxu0
    %484 = vmatprep.subr.mxu0 0.0
    %485 = vmatpush1.xpose.msra.mxu0 0.0
    %486 = vmatprep.subr.mxu0 0.0
    %487 = vmatpush1.xpose.msra.mxu0 0.0
    %488 = vmatprep.subr.mxu0 0.0
    %489 = vmatpush1.xpose.msra.mxu0 0.0
    %490 = vmatprep.subr.mxu0 0.0
    %491 = vmatpush1.xpose.msra.mxu0 0.0
    %492 = vmatprep.subr.mxu0 0.0
    %493 = vmatpush1.xpose.msra.mxu0 0.0
    %494 = vmatprep.subr.mxu0 0.0
    %495 = vmatpush1.xpose.msra.mxu0 0.0
    %496 = vmatprep.subr.mxu0 0.0
    %497 = vmatpush1.xpose.msra.mxu0 0.0
    %498 = vmatprep.subr.mxu0 0.0
    %499 = vmatpush1.xpose.msra.mxu0 0.0
    %500 = vmatprep.subr.mxu0 0.0
    %501 = vmatpush1.xpose.msra.mxu0 0.0
    %502 = vmatprep.subr.mxu0 0.0
    %503 = vmatpush1.xpose.msra.mxu0 0.0
    %504 = vmatprep.subr.mxu0 0.0
    %505 = vmatpush1.xpose.msra.mxu0 0.0
    %506 = vmatprep.subr.mxu0 0.0
    %507 = vmatpush1.xpose.msra.mxu0 0.0
    %508 = vmatprep.subr.mxu0 0.0
    %509 = vmatpush1.xpose.msra.mxu0 0.0
    %510 = vmatprep.subr.mxu0 0.0
    %511 = vmatpush1.xpose.msra.mxu0 0.0
    %512 = vmatprep.subr.mxu0 0.0
    %513 = vmatpush1.xpose.msra.mxu0 0.0
    %514 = vmatprep.subr.mxu0 %v262
    %515 = vmatpush1.xpose.msra.mxu0 %v260
    %516 = vmatprep.subr.mxu0 0.0
    %517 = vmatpush2.xpose.msra.mxu0 0.0
    %518 = vmatprep.subr.mxu0 0.0
    %519 = vmatpush2.xpose.msra.mxu0 0.0
    %520 = vmatprep.subr.mxu0 0.0
    %521 = vmatpush2.xpose.msra.mxu0 0.0
    %522 = vmatprep.subr.mxu0 0.0
    %523 = vmatpush2.xpose.msra.mxu0 0.0
    %524 = vmatprep.subr.mxu0 0.0
    %525 = vmatpush2.xpose.msra.mxu0 0.0
    %526 = vmatprep.subr.mxu0 0.0
    %527 = vmatpush2.xpose.msra.mxu0 0.0
    %528 = vmatprep.subr.mxu0 0.0
    %529 = vmatpush2.xpose.msra.mxu0 0.0
    %530 = vmatprep.subr.mxu0 0.0
    %531 = vmatpush2.xpose.msra.mxu0 0.0
    %532 = vmatprep.subr.mxu0 0.0
    %533 = vmatpush2.xpose.msra.mxu0 0.0
    %534 = vmatprep.subr.mxu0 0.0
    %535 = vmatpush2.xpose.msra.mxu0 0.0
    %536 = vmatprep.subr.mxu0 0.0
    %537 = vmatpush2.xpose.msra.mxu0 0.0
    %538 = vmatprep.subr.mxu0 0.0
    %539 = vmatpush2.xpose.msra.mxu0 0.0
    %540 = vmatprep.subr.mxu0 0.0
    %541 = vmatpush2.xpose.msra.mxu0 0.0
    %542 = vmatprep.subr.mxu0 0.0
    %543 = vmatpush2.xpose.msra.mxu0 0.0
    %544 = vmatprep.subr.mxu0 0.0
    %545 = vmatpush2.xpose.msra.mxu0 0.0
    %546 = vmatprep.subr.mxu0 0.0
    %547 = vmatpush2.xpose.msra.mxu0 0.0
    %548 = vmatprep.mubr.f32.mxu0 %v86
    %549 = vmatmul.mubr.f32.gmra.mxu0 %v84
    %v550 = vpop.f32.mrf.mxu0
    %v551 = vadd.f32 %v481, %v550
    %v552 = vpop.f32.mrf.mxu0
    %553 = vdwg.mxu0
    %554 = vmatprep.subr.mxu0 0.0
    %555 = vmatpush1.xpose.msra.mxu0 0.0
    %556 = vmatprep.subr.mxu0 0.0
    %557 = vmatpush1.xpose.msra.mxu0 0.0
    %558 = vmatprep.subr.mxu0 0.0
    %559 = vmatpush1.xpose.msra.mxu0 0.0
    %560 = vmatprep.subr.mxu0 0.0
    %561 = vmatpush1.xpose.msra.mxu0 0.0
    %562 = vmatprep.subr.mxu0 0.0
    %563 = vmatpush1.xpose.msra.mxu0 0.0
    %564 = vmatprep.subr.mxu0 0.0
    %565 = vmatpush1.xpose.msra.mxu0 0.0
    %566 = vmatprep.subr.mxu0 0.0
    %567 = vmatpush1.xpose.msra.mxu0 0.0
    %568 = vmatprep.subr.mxu0 0.0
    %569 = vmatpush1.xpose.msra.mxu0 0.0
    %570 = vmatprep.subr.mxu0 0.0
    %571 = vmatpush1.xpose.msra.mxu0 0.0
    %572 = vmatprep.subr.mxu0 0.0
    %573 = vmatpush1.xpose.msra.mxu0 0.0
    %574 = vmatprep.subr.mxu0 0.0
    %575 = vmatpush1.xpose.msra.mxu0 0.0
    %576 = vmatprep.subr.mxu0 0.0
    %577 = vmatpush1.xpose.msra.mxu0 0.0
    %578 = vmatprep.subr.mxu0 0.0
    %579 = vmatpush1.xpose.msra.mxu0 0.0
    %580 = vmatprep.subr.mxu0 0.0
    %581 = vmatpush1.xpose.msra.mxu0 0.0
    %582 = vmatprep.subr.mxu0 0.0
    %583 = vmatpush1.xpose.msra.mxu0 0.0
    %584 = vmatprep.subr.mxu0 %v278
    %585 = vmatpush1.xpose.msra.mxu0 %v270
    %586 = vmatprep.subr.mxu0 0.0
    %587 = vmatpush2.xpose.msra.mxu0 0.0
    %588 = vmatprep.subr.mxu0 0.0
    %589 = vmatpush2.xpose.msra.mxu0 0.0
    %590 = vmatprep.subr.mxu0 0.0
    %591 = vmatpush2.xpose.msra.mxu0 0.0
    %592 = vmatprep.subr.mxu0 0.0
    %593 = vmatpush2.xpose.msra.mxu0 0.0
    %594 = vmatprep.subr.mxu0 0.0
    %595 = vmatpush2.xpose.msra.mxu0 0.0
    %596 = vmatprep.subr.mxu0 0.0
    %597 = vmatpush2.xpose.msra.mxu0 0.0
    %598 = vmatprep.subr.mxu0 0.0
    %599 = vmatpush2.xpose.msra.mxu0 0.0
    %600 = vmatprep.subr.mxu0 0.0
    %601 = vmatpush2.xpose.msra.mxu0 0.0
    %602 = vmatprep.subr.mxu0 0.0
    %603 = vmatpush2.xpose.msra.mxu0 0.0
    %604 = vmatprep.subr.mxu0 0.0
    %605 = vmatpush2.xpose.msra.mxu0 0.0
    %606 = vmatprep.subr.mxu0 0.0
    %607 = vmatpush2.xpose.msra.mxu0 0.0
    %608 = vmatprep.subr.mxu0 0.0
    %609 = vmatpush2.xpose.msra.mxu0 0.0
    %610 = vmatprep.subr.mxu0 0.0
    %611 = vmatpush2.xpose.msra.mxu0 0.0
    %612 = vmatprep.subr.mxu0 0.0
    %613 = vmatpush2.xpose.msra.mxu0 0.0
    %614 = vmatprep.subr.mxu0 0.0
    %615 = vmatpush2.xpose.msra.mxu0 0.0
    %616 = vmatprep.subr.mxu0 0.0
    %617 = vmatpush2.xpose.msra.mxu0 0.0
    %618 = vmatprep.mubr.f32.mxu0 %v102
    %619 = vmatmul.mubr.f32.gmra.mxu0 %v94
    %v620 = vpop.f32.mrf.mxu0
    %v621 = vadd.f32 %v551, %v620
    %v622 = vpop.f32.mrf.mxu0
    %623 = vdwg.mxu0
    %624 = vmatprep.subr.mxu0 0.0
    %625 = vmatpush1.xpose.msra.mxu0 0.0
    %626 = vmatprep.subr.mxu0 0.0
    %627 = vmatpush1.xpose.msra.mxu0 0.0
    %628 = vmatprep.subr.mxu0 0.0
    %629 = vmatpush1.xpose.msra.mxu0 0.0
    %630 = vmatprep.subr.mxu0 0.0
    %631 = vmatpush1.xpose.msra.mxu0 0.0
    %632 = vmatprep.subr.mxu0 0.0
    %633 = vmatpush1.xpose.msra.mxu0 0.0
    %634 = vmatprep.subr.mxu0 0.0
    %635 = vmatpush1.xpose.msra.mxu0 0.0
    %636 = vmatprep.subr.mxu0 0.0
    %637 = vmatpush1.xpose.msra.mxu0 0.0
    %638 = vmatprep.subr.mxu0 0.0
    %639 = vmatpush1.xpose.msra.mxu0 0.0
    %640 = vmatprep.subr.mxu0 0.0
    %641 = vmatpush1.xpose.msra.mxu0 0.0
    %642 = vmatprep.subr.mxu0 0.0
    %643 = vmatpush1.xpose.msra.mxu0 0.0
    %644 = vmatprep.subr.mxu0 0.0
    %645 = vmatpush1.xpose.msra.mxu0 0.0
    %646 = vmatprep.subr.mxu0 0.0
    %647 = vmatpush1.xpose.msra.mxu0 0.0
    %648 = vmatprep.subr.mxu0 0.0
    %649 = vmatpush1.xpose.msra.mxu0 0.0
    %650 = vmatprep.subr.mxu0 0.0
    %651 = vmatpush1.xpose.msra.mxu0 0.0
    %652 = vmatprep.subr.mxu0 0.0
    %653 = vmatpush1.xpose.msra.mxu0 0.0
    %654 = vmatprep.subr.mxu0 %v279
    %655 = vmatpush1.xpose.msra.mxu0 %v277
    %656 = vmatprep.subr.mxu0 0.0
    %657 = vmatpush2.xpose.msra.mxu0 0.0
    %658 = vmatprep.subr.mxu0 0.0
    %659 = vmatpush2.xpose.msra.mxu0 0.0
    %660 = vmatprep.subr.mxu0 0.0
    %661 = vmatpush2.xpose.msra.mxu0 0.0
    %662 = vmatprep.subr.mxu0 0.0
    %663 = vmatpush2.xpose.msra.mxu0 0.0
    %664 = vmatprep.subr.mxu0 0.0
    %665 = vmatpush2.xpose.msra.mxu0 0.0
    %666 = vmatprep.subr.mxu0 0.0
    %667 = vmatpush2.xpose.msra.mxu0 0.0
    %668 = vmatprep.subr.mxu0 0.0
    %669 = vmatpush2.xpose.msra.mxu0 0.0
    %670 = vmatprep.subr.mxu0 0.0
    %671 = vmatpush2.xpose.msra.mxu0 0.0
    %672 = vmatprep.subr.mxu0 0.0
    %673 = vmatpush2.xpose.msra.mxu0 0.0
    %674 = vmatprep.subr.mxu0 0.0
    %675 = vmatpush2.xpose.msra.mxu0 0.0
    %676 = vmatprep.subr.mxu0 0.0
    %677 = vmatpush2.xpose.msra.mxu0 0.0
    %678 = vmatprep.subr.mxu0 0.0
    %679 = vmatpush2.xpose.msra.mxu0 0.0
    %680 = vmatprep.subr.mxu0 0.0
    %681 = vmatpush2.xpose.msra.mxu0 0.0
    %682 = vmatprep.subr.mxu0 0.0
    %683 = vmatpush2.xpose.msra.mxu0 0.0
    %684 = vmatprep.subr.mxu0 0.0
    %685 = vmatpush2.xpose.msra.mxu0 0.0
    %686 = vmatprep.subr.mxu0 0.0
    %687 = vmatpush2.xpose.msra.mxu0 0.0
    %688 = vmatprep.mubr.f32.mxu0 %v103
    %689 = vmatmul.mubr.f32.gmra.mxu0 %v101
    %v690 = vpop.f32.mrf.mxu0
    %v691 = vadd.f32 %v621, %v690
    %v692 = vpop.f32.mrf.mxu0
    %693 = vdwg.mxu0
    %694 = vmatprep.subr.mxu0 0.0
    %695 = vmatpush1.xpose.msra.mxu0 0.0
    %696 = vmatprep.subr.mxu0 0.0
    %697 = vmatpush1.xpose.msra.mxu0 0.0
    %698 = vmatprep.subr.mxu0 0.0
    %699 = vmatpush1.xpose.msra.mxu0 0.0
    %700 = vmatprep.subr.mxu0 0.0
    %701 = vmatpush1.xpose.msra.mxu0 0.0
    %702 = vmatprep.subr.mxu0 0.0
    %703 = vmatpush1.xpose.msra.mxu0 0.0
    %704 = vmatprep.subr.mxu0 0.0
    %705 = vmatpush1.xpose.msra.mxu0 0.0
    %706 = vmatprep.subr.mxu0 0.0
    %707 = vmatpush1.xpose.msra.mxu0 0.0
    %708 = vmatprep.subr.mxu0 0.0
    %709 = vmatpush1.xpose.msra.mxu0 0.0
    %710 = vmatprep.subr.mxu0 0.0
    %711 = vmatpush1.xpose.msra.mxu0 0.0
    %712 = vmatprep.subr.mxu0 0.0
    %713 = vmatpush1.xpose.msra.mxu0 0.0
    %714 = vmatprep.subr.mxu0 0.0
    %715 = vmatpush1.xpose.msra.mxu0 0.0
    %716 = vmatprep.subr.mxu0 0.0
    %717 = vmatpush1.xpose.msra.mxu0 0.0
    %718 = vmatprep.subr.mxu0 0.0
    %719 = vmatpush1.xpose.msra.mxu0 0.0
    %720 = vmatprep.subr.mxu0 0.0
    %721 = vmatpush1.xpose.msra.mxu0 0.0
    %722 = vmatprep.subr.mxu0 0.0
    %723 = vmatpush1.xpose.msra.mxu0 0.0
    %724 = vmatprep.subr.mxu0 %v295
    %725 = vmatpush1.xpose.msra.mxu0 %v287
    %726 = vmatprep.subr.mxu0 0.0
    %727 = vmatpush2.xpose.msra.mxu0 0.0
    %728 = vmatprep.subr.mxu0 0.0
    %729 = vmatpush2.xpose.msra.mxu0 0.0
    %730 = vmatprep.subr.mxu0 0.0
    %731 = vmatpush2.xpose.msra.mxu0 0.0
    %732 = vmatprep.subr.mxu0 0.0
    %733 = vmatpush2.xpose.msra.mxu0 0.0
    %734 = vmatprep.subr.mxu0 0.0
    %735 = vmatpush2.xpose.msra.mxu0 0.0
    %736 = vmatprep.subr.mxu0 0.0
    %737 = vmatpush2.xpose.msra.mxu0 0.0
    %738 = vmatprep.subr.mxu0 0.0
    %739 = vmatpush2.xpose.msra.mxu0 0.0
    %740 = vmatprep.subr.mxu0 0.0
    %741 = vmatpush2.xpose.msra.mxu0 0.0
    %742 = vmatprep.subr.mxu0 0.0
    %743 = vmatpush2.xpose.msra.mxu0 0.0
    %744 = vmatprep.subr.mxu0 0.0
    %745 = vmatpush2.xpose.msra.mxu0 0.0
    %746 = vmatprep.subr.mxu0 0.0
    %747 = vmatpush2.xpose.msra.mxu0 0.0
    %748 = vmatprep.subr.mxu0 0.0
    %749 = vmatpush2.xpose.msra.mxu0 0.0
    %750 = vmatprep.subr.mxu0 0.0
    %751 = vmatpush2.xpose.msra.mxu0 0.0
    %752 = vmatprep.subr.mxu0 0.0
    %753 = vmatpush2.xpose.msra.mxu0 0.0
    %754 = vmatprep.subr.mxu0 0.0
    %755 = vmatpush2.xpose.msra.mxu0 0.0
    %756 = vmatprep.subr.mxu0 0.0
    %757 = vmatpush2.xpose.msra.mxu0 0.0
    %758 = vmatprep.mubr.f32.mxu0 %v119
    %759 = vmatmul.mubr.f32.gmra.mxu0 %v111
    %v760 = vpop.f32.mrf.mxu0
    %v761 = vadd.f32 %v691, %v760
    %v762 = vpop.f32.mrf.mxu0
    %763 = vdwg.mxu0
    %764 = vmatprep.subr.mxu0 0.0
    %765 = vmatpush1.xpose.msra.mxu0 0.0
    %766 = vmatprep.subr.mxu0 0.0
    %767 = vmatpush1.xpose.msra.mxu0 0.0
    %768 = vmatprep.subr.mxu0 0.0
    %769 = vmatpush1.xpose.msra.mxu0 0.0
    %770 = vmatprep.subr.mxu0 0.0
    %771 = vmatpush1.xpose.msra.mxu0 0.0
    %772 = vmatprep.subr.mxu0 0.0
    %773 = vmatpush1.xpose.msra.mxu0 0.0
    %774 = vmatprep.subr.mxu0 0.0
    %775 = vmatpush1.xpose.msra.mxu0 0.0
    %776 = vmatprep.subr.mxu0 0.0
    %777 = vmatpush1.xpose.msra.mxu0 0.0
    %778 = vmatprep.subr.mxu0 0.0
    %779 = vmatpush1.xpose.msra.mxu0 0.0
    %780 = vmatprep.subr.mxu0 0.0
    %781 = vmatpush1.xpose.msra.mxu0 0.0
    %782 = vmatprep.subr.mxu0 0.0
    %783 = vmatpush1.xpose.msra.mxu0 0.0
    %784 = vmatprep.subr.mxu0 0.0
    %785 = vmatpush1.xpose.msra.mxu0 0.0
    %786 = vmatprep.subr.mxu0 0.0
    %787 = vmatpush1.xpose.msra.mxu0 0.0
    %788 = vmatprep.subr.mxu0 0.0
    %789 = vmatpush1.xpose.msra.mxu0 0.0
    %790 = vmatprep.subr.mxu0 0.0
    %791 = vmatpush1.xpose.msra.mxu0 0.0
    %792 = vmatprep.subr.mxu0 0.0
    %793 = vmatpush1.xpose.msra.mxu0 0.0
    %794 = vmatprep.subr.mxu0 %v296
    %795 = vmatpush1.xpose.msra.mxu0 %v294
    %796 = vmatprep.subr.mxu0 0.0
    %797 = vmatpush2.xpose.msra.mxu0 0.0
    %798 = vmatprep.subr.mxu0 0.0
    %799 = vmatpush2.xpose.msra.mxu0 0.0
    %800 = vmatprep.subr.mxu0 0.0
    %801 = vmatpush2.xpose.msra.mxu0 0.0
    %802 = vmatprep.subr.mxu0 0.0
    %803 = vmatpush2.xpose.msra.mxu0 0.0
    %804 = vmatprep.subr.mxu0 0.0
    %805 = vmatpush2.xpose.msra.mxu0 0.0
    %806 = vmatprep.subr.mxu0 0.0
    %807 = vmatpush2.xpose.msra.mxu0 0.0
    %808 = vmatprep.subr.mxu0 0.0
    %809 = vmatpush2.xpose.msra.mxu0 0.0
    %810 = vmatprep.subr.mxu0 0.0
    %811 = vmatpush2.xpose.msra.mxu0 0.0
    %812 = vmatprep.subr.mxu0 0.0
    %813 = vmatpush2.xpose.msra.mxu0 0.0
    %814 = vmatprep.subr.mxu0 0.0
    %815 = vmatpush2.xpose.msra.mxu0 0.0
    %816 = vmatprep.subr.mxu0 0.0
    %817 = vmatpush2.xpose.msra.mxu0 0.0
    %818 = vmatprep.subr.mxu0 0.0
    %819 = vmatpush2.xpose.msra.mxu0 0.0
    %820 = vmatprep.subr.mxu0 0.0
    %821 = vmatpush2.xpose.msra.mxu0 0.0
    %822 = vmatprep.subr.mxu0 0.0
    %823 = vmatpush2.xpose.msra.mxu0 0.0
    %824 = vmatprep.subr.mxu0 0.0
    %825 = vmatpush2.xpose.msra.mxu0 0.0
    %826 = vmatprep.subr.mxu0 0.0
    %827 = vmatpush2.xpose.msra.mxu0 0.0
    %828 = vmatprep.mubr.f32.mxu0 %v120
    %829 = vmatmul.mubr.f32.gmra.mxu0 %v118
    %v830 = vpop.f32.mrf.mxu0
    %v831 = vadd.f32 %v761, %v830
    %v832 = vpop.f32.mrf.mxu0
    %833 = vdwg.mxu0
    %834 = vmatprep.subr.mxu0 0.0
    %835 = vmatpush1.xpose.msra.mxu0 0.0
    %836 = vmatprep.subr.mxu0 0.0
    %837 = vmatpush1.xpose.msra.mxu0 0.0
    %838 = vmatprep.subr.mxu0 0.0
    %839 = vmatpush1.xpose.msra.mxu0 0.0
    %840 = vmatprep.subr.mxu0 0.0
    %841 = vmatpush1.xpose.msra.mxu0 0.0
    %842 = vmatprep.subr.mxu0 0.0
    %843 = vmatpush1.xpose.msra.mxu0 0.0
    %844 = vmatprep.subr.mxu0 0.0
    %845 = vmatpush1.xpose.msra.mxu0 0.0
    %846 = vmatprep.subr.mxu0 0.0
    %847 = vmatpush1.xpose.msra.mxu0 0.0
    %848 = vmatprep.subr.mxu0 0.0
    %849 = vmatpush1.xpose.msra.mxu0 0.0
    %850 = vmatprep.subr.mxu0 0.0
    %851 = vmatpush1.xpose.msra.mxu0 0.0
    %852 = vmatprep.subr.mxu0 0.0
    %853 = vmatpush1.xpose.msra.mxu0 0.0
    %854 = vmatprep.subr.mxu0 0.0
    %855 = vmatpush1.xpose.msra.mxu0 0.0
    %856 = vmatprep.subr.mxu0 0.0
    %857 = vmatpush1.xpose.msra.mxu0 0.0
    %858 = vmatprep.subr.mxu0 0.0
    %859 = vmatpush1.xpose.msra.mxu0 0.0
    %860 = vmatprep.subr.mxu0 0.0
    %861 = vmatpush1.xpose.msra.mxu0 0.0
    %862 = vmatprep.subr.mxu0 0.0
    %863 = vmatpush1.xpose.msra.mxu0 0.0
    %864 = vmatprep.subr.mxu0 %v312
    %865 = vmatpush1.xpose.msra.mxu0 %v304
    %866 = vmatprep.subr.mxu0 0.0
    %867 = vmatpush2.xpose.msra.mxu0 0.0
    %868 = vmatprep.subr.mxu0 0.0
    %869 = vmatpush2.xpose.msra.mxu0 0.0
    %870 = vmatprep.subr.mxu0 0.0
    %871 = vmatpush2.xpose.msra.mxu0 0.0
    %872 = vmatprep.subr.mxu0 0.0
    %873 = vmatpush2.xpose.msra.mxu0 0.0
    %874 = vmatprep.subr.mxu0 0.0
    %875 = vmatpush2.xpose.msra.mxu0 0.0
    %876 = vmatprep.subr.mxu0 0.0
    %877 = vmatpush2.xpose.msra.mxu0 0.0
    %878 = vmatprep.subr.mxu0 0.0
    %879 = vmatpush2.xpose.msra.mxu0 0.0
    %880 = vmatprep.subr.mxu0 0.0
    %881 = vmatpush2.xpose.msra.mxu0 0.0
    %882 = vmatprep.subr.mxu0 0.0
    %883 = vmatpush2.xpose.msra.mxu0 0.0
    %884 = vmatprep.subr.mxu0 0.0
    %885 = vmatpush2.xpose.msra.mxu0 0.0
    %886 = vmatprep.subr.mxu0 0.0
    %887 = vmatpush2.xpose.msra.mxu0 0.0
    %888 = vmatprep.subr.mxu0 0.0
    %889 = vmatpush2.xpose.msra.mxu0 0.0
    %890 = vmatprep.subr.mxu0 0.0
    %891 = vmatpush2.xpose.msra.mxu0 0.0
    %892 = vmatprep.subr.mxu0 0.0
    %893 = vmatpush2.xpose.msra.mxu0 0.0
    %894 = vmatprep.subr.mxu0 0.0
    %895 = vmatpush2.xpose.msra.mxu0 0.0
    %896 = vmatprep.subr.mxu0 0.0
    %897 = vmatpush2.xpose.msra.mxu0 0.0
    %898 = vmatprep.mubr.f32.mxu0 %v136
    %899 = vmatmul.mubr.f32.gmra.mxu0 %v128
    %v900 = vpop.f32.mrf.mxu0
    %v901 = vadd.f32 %v831, %v900
    %v902 = vpop.f32.mrf.mxu0
    %903 = vdwg.mxu0
    %904 = vmatprep.subr.mxu0 0.0
    %905 = vmatpush1.xpose.msra.mxu0 0.0
    %906 = vmatprep.subr.mxu0 0.0
    %907 = vmatpush1.xpose.msra.mxu0 0.0
    %908 = vmatprep.subr.mxu0 0.0
    %909 = vmatpush1.xpose.msra.mxu0 0.0
    %910 = vmatprep.subr.mxu0 0.0
    %911 = vmatpush1.xpose.msra.mxu0 0.0
    %912 = vmatprep.subr.mxu0 0.0
    %913 = vmatpush1.xpose.msra.mxu0 0.0
    %914 = vmatprep.subr.mxu0 0.0
    %915 = vmatpush1.xpose.msra.mxu0 0.0
    %916 = vmatprep.subr.mxu0 0.0
    %917 = vmatpush1.xpose.msra.mxu0 0.0
    %918 = vmatprep.subr.mxu0 0.0
    %919 = vmatpush1.xpose.msra.mxu0 0.0
    %920 = vmatprep.subr.mxu0 0.0
    %921 = vmatpush1.xpose.msra.mxu0 0.0
    %922 = vmatprep.subr.mxu0 0.0
    %923 = vmatpush1.xpose.msra.mxu0 0.0
    %924 = vmatprep.subr.mxu0 0.0
    %925 = vmatpush1.xpose.msra.mxu0 0.0
    %926 = vmatprep.subr.mxu0 0.0
    %927 = vmatpush1.xpose.msra.mxu0 0.0
    %928 = vmatprep.subr.mxu0 0.0
    %929 = vmatpush1.xpose.msra.mxu0 0.0
    %930 = vmatprep.subr.mxu0 0.0
    %931 = vmatpush1.xpose.msra.mxu0 0.0
    %932 = vmatprep.subr.mxu0 0.0
    %933 = vmatpush1.xpose.msra.mxu0 0.0
    %934 = vmatprep.subr.mxu0 %v313
    %935 = vmatpush1.xpose.msra.mxu0 %v311
    %936 = vmatprep.subr.mxu0 0.0
    %937 = vmatpush2.xpose.msra.mxu0 0.0
    %938 = vmatprep.subr.mxu0 0.0
    %939 = vmatpush2.xpose.msra.mxu0 0.0
    %940 = vmatprep.subr.mxu0 0.0
    %941 = vmatpush2.xpose.msra.mxu0 0.0
    %942 = vmatprep.subr.mxu0 0.0
    %943 = vmatpush2.xpose.msra.mxu0 0.0
    %944 = vmatprep.subr.mxu0 0.0
    %945 = vmatpush2.xpose.msra.mxu0 0.0
    %946 = vmatprep.subr.mxu0 0.0
    %947 = vmatpush2.xpose.msra.mxu0 0.0
    %948 = vmatprep.subr.mxu0 0.0
    %949 = vmatpush2.xpose.msra.mxu0 0.0
    %950 = vmatprep.subr.mxu0 0.0
    %951 = vmatpush2.xpose.msra.mxu0 0.0
    %952 = vmatprep.subr.mxu0 0.0
    %953 = vmatpush2.xpose.msra.mxu0 0.0
    %954 = vmatprep.subr.mxu0 0.0
    %955 = vmatpush2.xpose.msra.mxu0 0.0
    %956 = vmatprep.subr.mxu0 0.0
    %957 = vmatpush2.xpose.msra.mxu0 0.0
    %958 = vmatprep.subr.mxu0 0.0
    %959 = vmatpush2.xpose.msra.mxu0 0.0
    %960 = vmatprep.subr.mxu0 0.0
    %961 = vmatpush2.xpose.msra.mxu0 0.0
    %962 = vmatprep.subr.mxu0 0.0
    %963 = vmatpush2.xpose.msra.mxu0 0.0
    %964 = vmatprep.subr.mxu0 0.0
    %965 = vmatpush2.xpose.msra.mxu0 0.0
    %966 = vmatprep.subr.mxu0 0.0
    %967 = vmatpush2.xpose.msra.mxu0 0.0
    %968 = vmatprep.mubr.f32.mxu0 %v137
    %969 = vmatmul.mubr.f32.gmra.mxu0 %v135
    %v970 = vpop.f32.mrf.mxu0
    %v971 = vadd.f32 %v901, %v970
    %v972 = vpop.f32.mrf.mxu0
    %973 = vdwg.mxu0
    %974 = vmatprep.subr.mxu0 0.0
    %975 = vmatpush1.xpose.msra.mxu0 0.0
    %976 = vmatprep.subr.mxu0 0.0
    %977 = vmatpush1.xpose.msra.mxu0 0.0
    %978 = vmatprep.subr.mxu0 0.0
    %979 = vmatpush1.xpose.msra.mxu0 0.0
    %980 = vmatprep.subr.mxu0 0.0
    %981 = vmatpush1.xpose.msra.mxu0 0.0
    %982 = vmatprep.subr.mxu0 0.0
    %983 = vmatpush1.xpose.msra.mxu0 0.0
    %984 = vmatprep.subr.mxu0 0.0
    %985 = vmatpush1.xpose.msra.mxu0 0.0
    %986 = vmatprep.subr.mxu0 0.0
    %987 = vmatpush1.xpose.msra.mxu0 0.0
    %988 = vmatprep.subr.mxu0 0.0
    %989 = vmatpush1.xpose.msra.mxu0 0.0
    %990 = vmatprep.subr.mxu0 0.0
    %991 = vmatpush1.xpose.msra.mxu0 0.0
    %992 = vmatprep.subr.mxu0 0.0
    %993 = vmatpush1.xpose.msra.mxu0 0.0
    %994 = vmatprep.subr.mxu0 0.0
    %995 = vmatpush1.xpose.msra.mxu0 0.0
    %996 = vmatprep.subr.mxu0 0.0
    %997 = vmatpush1.xpose.msra.mxu0 0.0
    %998 = vmatprep.subr.mxu0 0.0
    %999 = vmatpush1.xpose.msra.mxu0 0.0
    %1000 = vmatprep.subr.mxu0 0.0
    %1001 = vmatpush1.xpose.msra.mxu0 0.0
    %1002 = vmatprep.subr.mxu0 0.0
    %1003 = vmatpush1.xpose.msra.mxu0 0.0
    %1004 = vmatprep.subr.mxu0 %v329
    %1005 = vmatpush1.xpose.msra.mxu0 %v321
    %1006 = vmatprep.subr.mxu0 0.0
    %1007 = vmatpush2.xpose.msra.mxu0 0.0
    %1008 = vmatprep.subr.mxu0 0.0
    %1009 = vmatpush2.xpose.msra.mxu0 0.0
    %1010 = vmatprep.subr.mxu0 0.0
    %1011 = vmatpush2.xpose.msra.mxu0 0.0
    %1012 = vmatprep.subr.mxu0 0.0
    %1013 = vmatpush2.xpose.msra.mxu0 0.0
    %1014 = vmatprep.subr.mxu0 0.0
    %1015 = vmatpush2.xpose.msra.mxu0 0.0
    %1016 = vmatprep.subr.mxu0 0.0
    %1017 = vmatpush2.xpose.msra.mxu0 0.0
    %1018 = vmatprep.subr.mxu0 0.0
    %1019 = vmatpush2.xpose.msra.mxu0 0.0
    %1020 = vmatprep.subr.mxu0 0.0
    %1021 = vmatpush2.xpose.msra.mxu0 0.0
    %1022 = vmatprep.subr.mxu0 0.0
    %1023 = vmatpush2.xpose.msra.mxu0 0.0
    %1024 = vmatprep.subr.mxu0 0.0
    %1025 = vmatpush2.xpose.msra.mxu0 0.0
    %1026 = vmatprep.subr.mxu0 0.0
    %1027 = vmatpush2.xpose.msra.mxu0 0.0
    %1028 = vmatprep.subr.mxu0 0.0
    %1029 = vmatpush2.xpose.msra.mxu0 0.0
    %1030 = vmatprep.subr.mxu0 0.0
    %1031 = vmatpush2.xpose.msra.mxu0 0.0
    %1032 = vmatprep.subr.mxu0 0.0
    %1033 = vmatpush2.xpose.msra.mxu0 0.0
    %1034 = vmatprep.subr.mxu0 0.0
    %1035 = vmatpush2.xpose.msra.mxu0 0.0
    %1036 = vmatprep.subr.mxu0 0.0
    %1037 = vmatpush2.xpose.msra.mxu0 0.0
    %1038 = vmatprep.mubr.f32.mxu0 %v153
    %1039 = vmatmul.mubr.f32.gmra.mxu0 %v145
    %v1040 = vpop.f32.mrf.mxu0
    %v1041 = vadd.f32 %v971, %v1040
    %v1042 = vpop.f32.mrf.mxu0
    %1043 = vdwg.mxu0
    %1044 = vmatprep.subr.mxu0 0.0
    %1045 = vmatpush1.xpose.msra.mxu0 0.0
    %1046 = vmatprep.subr.mxu0 0.0
    %1047 = vmatpush1.xpose.msra.mxu0 0.0
    %1048 = vmatprep.subr.mxu0 0.0
    %1049 = vmatpush1.xpose.msra.mxu0 0.0
    %1050 = vmatprep.subr.mxu0 0.0
    %1051 = vmatpush1.xpose.msra.mxu0 0.0
    %1052 = vmatprep.subr.mxu0 0.0
    %1053 = vmatpush1.xpose.msra.mxu0 0.0
    %1054 = vmatprep.subr.mxu0 0.0
    %1055 = vmatpush1.xpose.msra.mxu0 0.0
    %1056 = vmatprep.subr.mxu0 0.0
    %1057 = vmatpush1.xpose.msra.mxu0 0.0
    %1058 = vmatprep.subr.mxu0 0.0
    %1059 = vmatpush1.xpose.msra.mxu0 0.0
    %1060 = vmatprep.subr.mxu0 0.0
    %1061 = vmatpush1.xpose.msra.mxu0 0.0
    %1062 = vmatprep.subr.mxu0 0.0
    %1063 = vmatpush1.xpose.msra.mxu0 0.0
    %1064 = vmatprep.subr.mxu0 0.0
    %1065 = vmatpush1.xpose.msra.mxu0 0.0
    %1066 = vmatprep.subr.mxu0 0.0
    %1067 = vmatpush1.xpose.msra.mxu0 0.0
    %1068 = vmatprep.subr.mxu0 0.0
    %1069 = vmatpush1.xpose.msra.mxu0 0.0
    %1070 = vmatprep.subr.mxu0 0.0
    %1071 = vmatpush1.xpose.msra.mxu0 0.0
    %1072 = vmatprep.subr.mxu0 0.0
    %1073 = vmatpush1.xpose.msra.mxu0 0.0
    %1074 = vmatprep.subr.mxu0 %v330
    %1075 = vmatpush1.xpose.msra.mxu0 %v328
    %1076 = vmatprep.subr.mxu0 0.0
    %1077 = vmatpush2.xpose.msra.mxu0 0.0
    %1078 = vmatprep.subr.mxu0 0.0
    %1079 = vmatpush2.xpose.msra.mxu0 0.0
    %1080 = vmatprep.subr.mxu0 0.0
    %1081 = vmatpush2.xpose.msra.mxu0 0.0
    %1082 = vmatprep.subr.mxu0 0.0
    %1083 = vmatpush2.xpose.msra.mxu0 0.0
    %1084 = vmatprep.subr.mxu0 0.0
    %1085 = vmatpush2.xpose.msra.mxu0 0.0
    %1086 = vmatprep.subr.mxu0 0.0
    %1087 = vmatpush2.xpose.msra.mxu0 0.0
    %1088 = vmatprep.subr.mxu0 0.0
    %1089 = vmatpush2.xpose.msra.mxu0 0.0
    %1090 = vmatprep.subr.mxu0 0.0
    %1091 = vmatpush2.xpose.msra.mxu0 0.0
    %1092 = vmatprep.subr.mxu0 0.0
    %1093 = vmatpush2.xpose.msra.mxu0 0.0
    %1094 = vmatprep.subr.mxu0 0.0
    %1095 = vmatpush2.xpose.msra.mxu0 0.0
    %1096 = vmatprep.subr.mxu0 0.0
    %1097 = vmatpush2.xpose.msra.mxu0 0.0
    %1098 = vmatprep.subr.mxu0 0.0
    %1099 = vmatpush2.xpose.msra.mxu0 0.0
    %1100 = vmatprep.subr.mxu0 0.0
    %1101 = vmatpush2.xpose.msra.mxu0 0.0
    %1102 = vmatprep.subr.mxu0 0.0
    %1103 = vmatpush2.xpose.msra.mxu0 0.0
    %1104 = vmatprep.subr.mxu0 0.0
    %1105 = vmatpush2.xpose.msra.mxu0 0.0
    %1106 = vmatprep.subr.mxu0 0.0
    %1107 = vmatpush2.xpose.msra.mxu0 0.0
    %1108 = vmatprep.mubr.f32.mxu0 %v154
    %1109 = vmatmul.mubr.f32.gmra.mxu0 %v152
    %v1110 = vpop.f32.mrf.mxu0
    %v1111 = vadd.f32 %v1041, %v1110
    %v1112 = vpop.f32.mrf.mxu0
    %1113 = vdwg.mxu0
    %1114 = vmatprep.subr.mxu0 0.0
    %1115 = vmatpush1.xpose.msra.mxu0 0.0
    %1116 = vmatprep.subr.mxu0 0.0
    %1117 = vmatpush1.xpose.msra.mxu0 0.0
    %1118 = vmatprep.subr.mxu0 0.0
    %1119 = vmatpush1.xpose.msra.mxu0 0.0
    %1120 = vmatprep.subr.mxu0 0.0
    %1121 = vmatpush1.xpose.msra.mxu0 0.0
    %1122 = vmatprep.subr.mxu0 0.0
    %1123 = vmatpush1.xpose.msra.mxu0 0.0
    %1124 = vmatprep.subr.mxu0 0.0
    %1125 = vmatpush1.xpose.msra.mxu0 0.0
    %1126 = vmatprep.subr.mxu0 0.0
    %1127 = vmatpush1.xpose.msra.mxu0 0.0
    %1128 = vmatprep.subr.mxu0 0.0
    %1129 = vmatpush1.xpose.msra.mxu0 0.0
    %1130 = vmatprep.subr.mxu0 0.0
    %1131 = vmatpush1.xpose.msra.mxu0 0.0
    %1132 = vmatprep.subr.mxu0 0.0
    %1133 = vmatpush1.xpose.msra.mxu0 0.0
    %1134 = vmatprep.subr.mxu0 0.0
    %1135 = vmatpush1.xpose.msra.mxu0 0.0
    %1136 = vmatprep.subr.mxu0 0.0
    %1137 = vmatpush1.xpose.msra.mxu0 0.0
    %1138 = vmatprep.subr.mxu0 0.0
    %1139 = vmatpush1.xpose.msra.mxu0 0.0
    %1140 = vmatprep.subr.mxu0 0.0
    %1141 = vmatpush1.xpose.msra.mxu0 0.0
    %1142 = vmatprep.subr.mxu0 0.0
    %1143 = vmatpush1.xpose.msra.mxu0 0.0
    %1144 = vmatprep.subr.mxu0 %v346
    %1145 = vmatpush1.xpose.msra.mxu0 %v338
    %1146 = vmatprep.subr.mxu0 0.0
    %1147 = vmatpush2.xpose.msra.mxu0 0.0
    %1148 = vmatprep.subr.mxu0 0.0
    %1149 = vmatpush2.xpose.msra.mxu0 0.0
    %1150 = vmatprep.subr.mxu0 0.0
    %1151 = vmatpush2.xpose.msra.mxu0 0.0
    %1152 = vmatprep.subr.mxu0 0.0
    %1153 = vmatpush2.xpose.msra.mxu0 0.0
    %1154 = vmatprep.subr.mxu0 0.0
    %1155 = vmatpush2.xpose.msra.mxu0 0.0
    %1156 = vmatprep.subr.mxu0 0.0
    %1157 = vmatpush2.xpose.msra.mxu0 0.0
    %1158 = vmatprep.subr.mxu0 0.0
    %1159 = vmatpush2.xpose.msra.mxu0 0.0
    %1160 = vmatprep.subr.mxu0 0.0
    %1161 = vmatpush2.xpose.msra.mxu0 0.0
    %1162 = vmatprep.subr.mxu0 0.0
    %1163 = vmatpush2.xpose.msra.mxu0 0.0
    %1164 = vmatprep.subr.mxu0 0.0
    %1165 = vmatpush2.xpose.msra.mxu0 0.0
    %1166 = vmatprep.subr.mxu0 0.0
    %1167 = vmatpush2.xpose.msra.mxu0 0.0
    %1168 = vmatprep.subr.mxu0 0.0
    %1169 = vmatpush2.xpose.msra.mxu0 0.0
    %1170 = vmatprep.subr.mxu0 0.0
    %1171 = vmatpush2.xpose.msra.mxu0 0.0
    %1172 = vmatprep.subr.mxu0 0.0
    %1173 = vmatpush2.xpose.msra.mxu0 0.0
    %1174 = vmatprep.subr.mxu0 0.0
    %1175 = vmatpush2.xpose.msra.mxu0 0.0
    %1176 = vmatprep.subr.mxu0 0.0
    %1177 = vmatpush2.xpose.msra.mxu0 0.0
    %1178 = vmatprep.mubr.f32.mxu0 %v170
    %1179 = vmatmul.mubr.f32.gmra.mxu0 %v162
    %v1180 = vpop.f32.mrf.mxu0
    %v1181 = vadd.f32 %v1111, %v1180
    %v1182 = vpop.f32.mrf.mxu0
    %1183 = vdwg.mxu0
    %1184 = vmatprep.subr.mxu0 0.0
    %1185 = vmatpush1.xpose.msra.mxu0 0.0
    %1186 = vmatprep.subr.mxu0 0.0
    %1187 = vmatpush1.xpose.msra.mxu0 0.0
    %1188 = vmatprep.subr.mxu0 0.0
    %1189 = vmatpush1.xpose.msra.mxu0 0.0
    %1190 = vmatprep.subr.mxu0 0.0
    %1191 = vmatpush1.xpose.msra.mxu0 0.0
    %1192 = vmatprep.subr.mxu0 0.0
    %1193 = vmatpush1.xpose.msra.mxu0 0.0
    %1194 = vmatprep.subr.mxu0 0.0
    %1195 = vmatpush1.xpose.msra.mxu0 0.0
    %1196 = vmatprep.subr.mxu0 0.0
    %1197 = vmatpush1.xpose.msra.mxu0 0.0
    %1198 = vmatprep.subr.mxu0 0.0
    %1199 = vmatpush1.xpose.msra.mxu0 0.0
    %1200 = vmatprep.subr.mxu0 0.0
    %1201 = vmatpush1.xpose.msra.mxu0 0.0
    %1202 = vmatprep.subr.mxu0 0.0
    %1203 = vmatpush1.xpose.msra.mxu0 0.0
    %1204 = vmatprep.subr.mxu0 0.0
    %1205 = vmatpush1.xpose.msra.mxu0 0.0
    %1206 = vmatprep.subr.mxu0 0.0
    %1207 = vmatpush1.xpose.msra.mxu0 0.0
    %1208 = vmatprep.subr.mxu0 0.0
    %1209 = vmatpush1.xpose.msra.mxu0 0.0
    %1210 = vmatprep.subr.mxu0 0.0
    %1211 = vmatpush1.xpose.msra.mxu0 0.0
    %1212 = vmatprep.subr.mxu0 0.0
    %1213 = vmatpush1.xpose.msra.mxu0 0.0
    %1214 = vmatprep.subr.mxu0 %v347
    %1215 = vmatpush1.xpose.msra.mxu0 %v345
    %1216 = vmatprep.subr.mxu0 0.0
    %1217 = vmatpush2.xpose.msra.mxu0 0.0
    %1218 = vmatprep.subr.mxu0 0.0
    %1219 = vmatpush2.xpose.msra.mxu0 0.0
    %1220 = vmatprep.subr.mxu0 0.0
    %1221 = vmatpush2.xpose.msra.mxu0 0.0
    %1222 = vmatprep.subr.mxu0 0.0
    %1223 = vmatpush2.xpose.msra.mxu0 0.0
    %1224 = vmatprep.subr.mxu0 0.0
    %1225 = vmatpush2.xpose.msra.mxu0 0.0
    %1226 = vmatprep.subr.mxu0 0.0
    %1227 = vmatpush2.xpose.msra.mxu0 0.0
    %1228 = vmatprep.subr.mxu0 0.0
    %1229 = vmatpush2.xpose.msra.mxu0 0.0
    %1230 = vmatprep.subr.mxu0 0.0
    %1231 = vmatpush2.xpose.msra.mxu0 0.0
    %1232 = vmatprep.subr.mxu0 0.0
    %1233 = vmatpush2.xpose.msra.mxu0 0.0
    %1234 = vmatprep.subr.mxu0 0.0
    %1235 = vmatpush2.xpose.msra.mxu0 0.0
    %1236 = vmatprep.subr.mxu0 0.0
    %1237 = vmatpush2.xpose.msra.mxu0 0.0
    %1238 = vmatprep.subr.mxu0 0.0
    %1239 = vmatpush2.xpose.msra.mxu0 0.0
    %1240 = vmatprep.subr.mxu0 0.0
    %1241 = vmatpush2.xpose.msra.mxu0 0.0
    %1242 = vmatprep.subr.mxu0 0.0
    %1243 = vmatpush2.xpose.msra.mxu0 0.0
    %1244 = vmatprep.subr.mxu0 0.0
    %1245 = vmatpush2.xpose.msra.mxu0 0.0
    %1246 = vmatprep.subr.mxu0 0.0
    %1247 = vmatpush2.xpose.msra.mxu0 0.0
    %1248 = vmatprep.mubr.f32.mxu0 %v171
    %1249 = vmatmul.mubr.f32.gmra.mxu0 %v169
    %v1250 = vpop.f32.mrf.mxu0
    %v1251 = vadd.f32 %v1181, %v1250
    %v1252 = vpop.f32.mrf.mxu0
    %1253 = vdwg.mxu0
    %1254 = vmatprep.subr.mxu0 0.0
    %1255 = vmatpush1.xpose.msra.mxu0 0.0
    %1256 = vmatprep.subr.mxu0 0.0
    %1257 = vmatpush1.xpose.msra.mxu0 0.0
    %1258 = vmatprep.subr.mxu0 0.0
    %1259 = vmatpush1.xpose.msra.mxu0 0.0
    %1260 = vmatprep.subr.mxu0 0.0
    %1261 = vmatpush1.xpose.msra.mxu0 0.0
    %1262 = vmatprep.subr.mxu0 0.0
    %1263 = vmatpush1.xpose.msra.mxu0 0.0
    %1264 = vmatprep.subr.mxu0 0.0
    %1265 = vmatpush1.xpose.msra.mxu0 0.0
    %1266 = vmatprep.subr.mxu0 0.0
    %1267 = vmatpush1.xpose.msra.mxu0 0.0
    %1268 = vmatprep.subr.mxu0 0.0
    %1269 = vmatpush1.xpose.msra.mxu0 0.0
    %1270 = vmatprep.subr.mxu0 0.0
    %1271 = vmatpush1.xpose.msra.mxu0 0.0
    %1272 = vmatprep.subr.mxu0 0.0
    %1273 = vmatpush1.xpose.msra.mxu0 0.0
    %1274 = vmatprep.subr.mxu0 0.0
    %1275 = vmatpush1.xpose.msra.mxu0 0.0
    %1276 = vmatprep.subr.mxu0 0.0
    %1277 = vmatpush1.xpose.msra.mxu0 0.0
    %1278 = vmatprep.subr.mxu0 0.0
    %1279 = vmatpush1.xpose.msra.mxu0 0.0
    %1280 = vmatprep.subr.mxu0 0.0
    %1281 = vmatpush1.xpose.msra.mxu0 0.0
    %1282 = vmatprep.subr.mxu0 0.0
    %1283 = vmatpush1.xpose.msra.mxu0 0.0
    %1284 = vmatprep.subr.mxu0 %v363
    %1285 = vmatpush1.xpose.msra.mxu0 %v355
    %1286 = vmatprep.subr.mxu0 0.0
    %1287 = vmatpush2.xpose.msra.mxu0 0.0
    %1288 = vmatprep.subr.mxu0 0.0
    %1289 = vmatpush2.xpose.msra.mxu0 0.0
    %1290 = vmatprep.subr.mxu0 0.0
    %1291 = vmatpush2.xpose.msra.mxu0 0.0
    %1292 = vmatprep.subr.mxu0 0.0
    %1293 = vmatpush2.xpose.msra.mxu0 0.0
    %1294 = vmatprep.subr.mxu0 0.0
    %1295 = vmatpush2.xpose.msra.mxu0 0.0
    %1296 = vmatprep.subr.mxu0 0.0
    %1297 = vmatpush2.xpose.msra.mxu0 0.0
    %1298 = vmatprep.subr.mxu0 0.0
    %1299 = vmatpush2.xpose.msra.mxu0 0.0
    %1300 = vmatprep.subr.mxu0 0.0
    %1301 = vmatpush2.xpose.msra.mxu0 0.0
    %1302 = vmatprep.subr.mxu0 0.0
    %1303 = vmatpush2.xpose.msra.mxu0 0.0
    %1304 = vmatprep.subr.mxu0 0.0
    %1305 = vmatpush2.xpose.msra.mxu0 0.0
    %1306 = vmatprep.subr.mxu0 0.0
    %1307 = vmatpush2.xpose.msra.mxu0 0.0
    %1308 = vmatprep.subr.mxu0 0.0
    %1309 = vmatpush2.xpose.msra.mxu0 0.0
    %1310 = vmatprep.subr.mxu0 0.0
    %1311 = vmatpush2.xpose.msra.mxu0 0.0
    %1312 = vmatprep.subr.mxu0 0.0
    %1313 = vmatpush2.xpose.msra.mxu0 0.0
    %1314 = vmatprep.subr.mxu0 0.0
    %1315 = vmatpush2.xpose.msra.mxu0 0.0
    %1316 = vmatprep.subr.mxu0 0.0
    %1317 = vmatpush2.xpose.msra.mxu0 0.0
    %1318 = vmatprep.mubr.f32.mxu0 %v187
    %1319 = vmatmul.mubr.f32.gmra.mxu0 %v179
    %v1320 = vpop.f32.mrf.mxu0
    %v1321 = vadd.f32 %v1251, %v1320
    %v1322 = vpop.f32.mrf.mxu0
    %1323 = vdwg.mxu0
    %1324 = vmatprep.subr.mxu0 0.0
    %1325 = vmatpush1.xpose.msra.mxu0 0.0
    %1326 = vmatprep.subr.mxu0 0.0
    %1327 = vmatpush1.xpose.msra.mxu0 0.0
    %1328 = vmatprep.subr.mxu0 0.0
    %1329 = vmatpush1.xpose.msra.mxu0 0.0
    %1330 = vmatprep.subr.mxu0 0.0
    %1331 = vmatpush1.xpose.msra.mxu0 0.0
    %1332 = vmatprep.subr.mxu0 0.0
    %1333 = vmatpush1.xpose.msra.mxu0 0.0
    %1334 = vmatprep.subr.mxu0 0.0
    %1335 = vmatpush1.xpose.msra.mxu0 0.0
    %1336 = vmatprep.subr.mxu0 0.0
    %1337 = vmatpush1.xpose.msra.mxu0 0.0
    %1338 = vmatprep.subr.mxu0 0.0
    %1339 = vmatpush1.xpose.msra.mxu0 0.0
    %1340 = vmatprep.subr.mxu0 0.0
    %1341 = vmatpush1.xpose.msra.mxu0 0.0
    %1342 = vmatprep.subr.mxu0 0.0
    %1343 = vmatpush1.xpose.msra.mxu0 0.0
    %1344 = vmatprep.subr.mxu0 0.0
    %1345 = vmatpush1.xpose.msra.mxu0 0.0
    %1346 = vmatprep.subr.mxu0 0.0
    %1347 = vmatpush1.xpose.msra.mxu0 0.0
    %1348 = vmatprep.subr.mxu0 0.0
    %1349 = vmatpush1.xpose.msra.mxu0 0.0
    %1350 = vmatprep.subr.mxu0 0.0
    %1351 = vmatpush1.xpose.msra.mxu0 0.0
    %1352 = vmatprep.subr.mxu0 0.0
    %1353 = vmatpush1.xpose.msra.mxu0 0.0
    %1354 = vmatprep.subr.mxu0 %v364
    %1355 = vmatpush1.xpose.msra.mxu0 %v362
    %1356 = vmatprep.subr.mxu0 0.0
    %1357 = vmatpush2.xpose.msra.mxu0 0.0
    %1358 = vmatprep.subr.mxu0 0.0
    %1359 = vmatpush2.xpose.msra.mxu0 0.0
    %1360 = vmatprep.subr.mxu0 0.0
    %1361 = vmatpush2.xpose.msra.mxu0 0.0
    %1362 = vmatprep.subr.mxu0 0.0
    %1363 = vmatpush2.xpose.msra.mxu0 0.0
    %1364 = vmatprep.subr.mxu0 0.0
    %1365 = vmatpush2.xpose.msra.mxu0 0.0
    %1366 = vmatprep.subr.mxu0 0.0
    %1367 = vmatpush2.xpose.msra.mxu0 0.0
    %1368 = vmatprep.subr.mxu0 0.0
    %1369 = vmatpush2.xpose.msra.mxu0 0.0
    %1370 = vmatprep.subr.mxu0 0.0
    %1371 = vmatpush2.xpose.msra.mxu0 0.0
    %1372 = vmatprep.subr.mxu0 0.0
    %1373 = vmatpush2.xpose.msra.mxu0 0.0
    %1374 = vmatprep.subr.mxu0 0.0
    %1375 = vmatpush2.xpose.msra.mxu0 0.0
    %1376 = vmatprep.subr.mxu0 0.0
    %1377 = vmatpush2.xpose.msra.mxu0 0.0
    %1378 = vmatprep.subr.mxu0 0.0
    %1379 = vmatpush2.xpose.msra.mxu0 0.0
    %1380 = vmatprep.subr.mxu0 0.0
    %1381 = vmatpush2.xpose.msra.mxu0 0.0
    %1382 = vmatprep.subr.mxu0 0.0
    %1383 = vmatpush2.xpose.msra.mxu0 0.0
    %1384 = vmatprep.subr.mxu0 0.0
    %1385 = vmatpush2.xpose.msra.mxu0 0.0
    %1386 = vmatprep.subr.mxu0 0.0
    %1387 = vmatpush2.xpose.msra.mxu0 0.0
    %1388 = vmatprep.mubr.f32.mxu0 %v188
    %1389 = vmatmul.mubr.f32.gmra.mxu0 %v186
    %v1390 = vpop.f32.mrf.mxu0
    %v1391 = vadd.f32 %v1321, %v1390
    %v1392 = vpop.f32.mrf.mxu0
    %1393 = vdwg.mxu0
    %1394 = vmatprep.subr.mxu0 0.0
    %1395 = vmatpush1.xpose.msra.mxu0 0.0
    %1396 = vmatprep.subr.mxu0 0.0
    %1397 = vmatpush1.xpose.msra.mxu0 0.0
    %1398 = vmatprep.subr.mxu0 0.0
    %1399 = vmatpush1.xpose.msra.mxu0 0.0
    %1400 = vmatprep.subr.mxu0 0.0
    %1401 = vmatpush1.xpose.msra.mxu0 0.0
    %1402 = vmatprep.subr.mxu0 0.0
    %1403 = vmatpush1.xpose.msra.mxu0 0.0
    %1404 = vmatprep.subr.mxu0 0.0
    %1405 = vmatpush1.xpose.msra.mxu0 0.0
    %1406 = vmatprep.subr.mxu0 0.0
    %1407 = vmatpush1.xpose.msra.mxu0 0.0
    %1408 = vmatprep.subr.mxu0 0.0
    %1409 = vmatpush1.xpose.msra.mxu0 0.0
    %1410 = vmatprep.subr.mxu0 0.0
    %1411 = vmatpush1.xpose.msra.mxu0 0.0
    %1412 = vmatprep.subr.mxu0 0.0
    %1413 = vmatpush1.xpose.msra.mxu0 0.0
    %1414 = vmatprep.subr.mxu0 0.0
    %1415 = vmatpush1.xpose.msra.mxu0 0.0
    %1416 = vmatprep.subr.mxu0 0.0
    %1417 = vmatpush1.xpose.msra.mxu0 0.0
    %1418 = vmatprep.subr.mxu0 0.0
    %1419 = vmatpush1.xpose.msra.mxu0 0.0
    %1420 = vmatprep.subr.mxu0 0.0
    %1421 = vmatpush1.xpose.msra.mxu0 0.0
    %1422 = vmatprep.subr.mxu0 0.0
    %1423 = vmatpush1.xpose.msra.mxu0 0.0
    %1424 = vmatprep.subr.mxu0 %v380
    %1425 = vmatpush1.xpose.msra.mxu0 %v372
    %1426 = vmatprep.subr.mxu0 0.0
    %1427 = vmatpush2.xpose.msra.mxu0 0.0
    %1428 = vmatprep.subr.mxu0 0.0
    %1429 = vmatpush2.xpose.msra.mxu0 0.0
    %1430 = vmatprep.subr.mxu0 0.0
    %1431 = vmatpush2.xpose.msra.mxu0 0.0
    %1432 = vmatprep.subr.mxu0 0.0
    %1433 = vmatpush2.xpose.msra.mxu0 0.0
    %1434 = vmatprep.subr.mxu0 0.0
    %1435 = vmatpush2.xpose.msra.mxu0 0.0
    %1436 = vmatprep.subr.mxu0 0.0
    %1437 = vmatpush2.xpose.msra.mxu0 0.0
    %1438 = vmatprep.subr.mxu0 0.0
    %1439 = vmatpush2.xpose.msra.mxu0 0.0
    %1440 = vmatprep.subr.mxu0 0.0
    %1441 = vmatpush2.xpose.msra.mxu0 0.0
    %1442 = vmatprep.subr.mxu0 0.0
    %1443 = vmatpush2.xpose.msra.mxu0 0.0
    %1444 = vmatprep.subr.mxu0 0.0
    %1445 = vmatpush2.xpose.msra.mxu0 0.0
    %1446 = vmatprep.subr.mxu0 0.0
    %1447 = vmatpush2.xpose.msra.mxu0 0.0
    %1448 = vmatprep.subr.mxu0 0.0
    %1449 = vmatpush2.xpose.msra.mxu0 0.0
    %1450 = vmatprep.subr.mxu0 0.0
    %1451 = vmatpush2.xpose.msra.mxu0 0.0
    %1452 = vmatprep.subr.mxu0 0.0
    %1453 = vmatpush2.xpose.msra.mxu0 0.0
    %1454 = vmatprep.subr.mxu0 0.0
    %1455 = vmatpush2.xpose.msra.mxu0 0.0
    %1456 = vmatprep.subr.mxu0 0.0
    %1457 = vmatpush2.xpose.msra.mxu0 0.0
    %1458 = vmatprep.mubr.f32.mxu0 %v204
    %1459 = vmatmul.mubr.f32.gmra.mxu0 %v196
    %v1460 = vpop.f32.mrf.mxu0
    %v1461 = vadd.f32 %v1391, %v1460
    %v1462 = vpop.f32.mrf.mxu0
    %1463 = vdwg.mxu0
    %1464 = vmatprep.subr.mxu0 0.0
    %1465 = vmatpush1.xpose.msra.mxu0 0.0
    %1466 = vmatprep.subr.mxu0 0.0
    %1467 = vmatpush1.xpose.msra.mxu0 0.0
    %1468 = vmatprep.subr.mxu0 0.0
    %1469 = vmatpush1.xpose.msra.mxu0 0.0
    %1470 = vmatprep.subr.mxu0 0.0
    %1471 = vmatpush1.xpose.msra.mxu0 0.0
    %1472 = vmatprep.subr.mxu0 0.0
    %1473 = vmatpush1.xpose.msra.mxu0 0.0
    %1474 = vmatprep.subr.mxu0 0.0
    %1475 = vmatpush1.xpose.msra.mxu0 0.0
    %1476 = vmatprep.subr.mxu0 0.0
    %1477 = vmatpush1.xpose.msra.mxu0 0.0
    %1478 = vmatprep.subr.mxu0 0.0
    %1479 = vmatpush1.xpose.msra.mxu0 0.0
    %1480 = vmatprep.subr.mxu0 0.0
    %1481 = vmatpush1.xpose.msra.mxu0 0.0
    %1482 = vmatprep.subr.mxu0 0.0
    %1483 = vmatpush1.xpose.msra.mxu0 0.0
    %1484 = vmatprep.subr.mxu0 0.0
    %1485 = vmatpush1.xpose.msra.mxu0 0.0
    %1486 = vmatprep.subr.mxu0 0.0
    %1487 = vmatpush1.xpose.msra.mxu0 0.0
    %1488 = vmatprep.subr.mxu0 0.0
    %1489 = vmatpush1.xpose.msra.mxu0 0.0
    %1490 = vmatprep.subr.mxu0 0.0
    %1491 = vmatpush1.xpose.msra.mxu0 0.0
    %1492 = vmatprep.subr.mxu0 0.0
    %1493 = vmatpush1.xpose.msra.mxu0 0.0
    %1494 = vmatprep.subr.mxu0 %v381
    %1495 = vmatpush1.xpose.msra.mxu0 %v379
    %1496 = vmatprep.subr.mxu0 0.0
    %1497 = vmatpush2.xpose.msra.mxu0 0.0
    %1498 = vmatprep.subr.mxu0 0.0
    %1499 = vmatpush2.xpose.msra.mxu0 0.0
    %1500 = vmatprep.subr.mxu0 0.0
    %1501 = vmatpush2.xpose.msra.mxu0 0.0
    %1502 = vmatprep.subr.mxu0 0.0
    %1503 = vmatpush2.xpose.msra.mxu0 0.0
    %1504 = vmatprep.subr.mxu0 0.0
    %1505 = vmatpush2.xpose.msra.mxu0 0.0
    %1506 = vmatprep.subr.mxu0 0.0
    %1507 = vmatpush2.xpose.msra.mxu0 0.0
    %1508 = vmatprep.subr.mxu0 0.0
    %1509 = vmatpush2.xpose.msra.mxu0 0.0
    %1510 = vmatprep.subr.mxu0 0.0
    %1511 = vmatpush2.xpose.msra.mxu0 0.0
    %1512 = vmatprep.subr.mxu0 0.0
    %1513 = vmatpush2.xpose.msra.mxu0 0.0
    %1514 = vmatprep.subr.mxu0 0.0
    %1515 = vmatpush2.xpose.msra.mxu0 0.0
    %1516 = vmatprep.subr.mxu0 0.0
    %1517 = vmatpush2.xpose.msra.mxu0 0.0
    %1518 = vmatprep.subr.mxu0 0.0
    %1519 = vmatpush2.xpose.msra.mxu0 0.0
    %1520 = vmatprep.subr.mxu0 0.0
    %1521 = vmatpush2.xpose.msra.mxu0 0.0
    %1522 = vmatprep.subr.mxu0 0.0
    %1523 = vmatpush2.xpose.msra.mxu0 0.0
    %1524 = vmatprep.subr.mxu0 0.0
    %1525 = vmatpush2.xpose.msra.mxu0 0.0
    %1526 = vmatprep.subr.mxu0 0.0
    %1527 = vmatpush2.xpose.msra.mxu0 0.0
    %1528 = vmatprep.mubr.f32.mxu0 %v205
    %1529 = vmatmul.mubr.f32.gmra.mxu0 %v203
    %v1530 = vpop.f32.mrf.mxu0
    %v1531 = vadd.f32 %v1461, %v1530
    %v1532 = vpop.f32.mrf.mxu0
    %1533 = vdwg.mxu0
    %vm1534 = vcmask 9216
    %1535 = vst.msk [vmem:[#allocation7] sm:$0x3] %vm1534, %v1531
    // Predicated region
    $region22: #{tpu_custom_call.1} parent=1 // pred_check
      _
    $region23: #{tpu_custom_call.1} parent=1 // pred_check_branch
      %1537 = sbr.rel (0) target = $region25
    $region24: #{tpu_custom_call.1} parent=1 // pred_region
      %s1539 = ssub.s32 32, 32
      %1540 = vsyncadd [#allocation4], %s1539
      %s1542 = sshll.u32 [#allocation7], 4
      %s1543 = int_to_ptr.vmem [resolvable:$true] %s1542
      %1545 = dma.vmem_to_hbm [thread:$0]  %s1543, 32, %s3, [#allocation4]
    $region25: #{tpu_custom_call.1} parent=1 // pred_fallthru
      _
    // Predicated region
    $region26: #{tpu_custom_call.1} parent=1 // pred_check
      _
    $region27: #{tpu_custom_call.1} parent=1 // pred_check_branch
      %1547 = sbr.rel (0) target = $region29
    $region28: #{tpu_custom_call.1} parent=1 // pred_region
      %1548 = dma.done [#allocation4], 32
    $region29: #{tpu_custom_call.1} parent=1 // pred_fallthru
      _
    %1549 = vsyncpa [#allocation3], 1
    %1550 = vsyncpa [#allocation6], 1
    %1551 = vsyncpa [#allocation4], 1

</llo_original>
